<compile_context>
chip_gen: v6e
topology: v6e:2x2x1
jax: 0.10.0
libtpu: 0.0.40
codegen_flags: <defaults>
</compile_context>

<pallas_src>
import functools
import math

import jax
import jax.numpy as jnp
from jax.experimental import pallas as pl
from jax.experimental.pallas import tpu as pltpu

FEATURES = 4
HIDDEN = 32
OUT_DIM = 2
OUT_PAD = 128   # lane-dense fc2 output slab (multiple of 128)
HW_PAD = 128    # lane-dense intermediate width for the tiled path


# ----------------------------------------------------------------------------
# geometry / budget helpers
# ----------------------------------------------------------------------------
def _round_up(x, m):
    return (x + m - 1) // m * m


def _tpu_vmem_bytes():
    try:
        return int(getattr(pltpu.get_tpu_info(), "vmem_capacity_bytes", 64 << 20))
    except Exception:
        return 64 << 20


def _budgets():
    """(vmem_limit_bytes, fused_node_cap, tile_m, tile_k) per TPU generation."""
    vmem = _tpu_vmem_bytes()
    if vmem >= (128 << 20):                 # v5e / v6e: 128 MiB physical VMEM
        return 110 << 20, 4096, 1024, 2048
    return 48 << 20, 2048, 512, 1024        # v7x (or unknown): 64 MiB VMEM


# ----------------------------------------------------------------------------
# fused single-kernel path (grid == (1,), everything resident in VMEM)
# ----------------------------------------------------------------------------
def _fused_kernel(x_ref, a_ref, w1_ref, b1_ref,
                  wg1_ref, bg1_ref, wg2_ref, bg2_ref, wg3_ref, bg3_ref,
                  w2_ref, b2_ref, out_ref):
    bf16 = jnp.bfloat16
    # fc1 + ReLU (row-local), then pre-apply Wg1 so each GCN step is one A@hw.
    h = jnp.dot(x_ref[...], w1_ref[...], preferred_element_type=jnp.float32)
    h = jnp.maximum(h + b1_ref[...], 0.0)                          # f32 epilogue
    hw = jnp.dot(h.astype(bf16), wg1_ref[...],
                 preferred_element_type=jnp.float32).astype(bf16)
    # GCN 1: relu(A @ hw + bg1) @ Wg2
    agg = jnp.dot(a_ref[...], hw, preferred_element_type=jnp.float32)
    h = jnp.maximum(agg + bg1_ref[...], 0.0)
    hw = jnp.dot(h.astype(bf16), wg2_ref[...],
                 preferred_element_type=jnp.float32).astype(bf16)
    # GCN 2: relu(A @ hw + bg2) @ Wg3
    agg = jnp.dot(a_ref[...], hw, preferred_element_type=jnp.float32)
    h = jnp.maximum(agg + bg2_ref[...], 0.0)
    hw = jnp.dot(h.astype(bf16), wg3_ref[...],
                 preferred_element_type=jnp.float32).astype(bf16)
    # GCN 3 fused with fc2; output is a 128-lane-dense f32 slab.
    agg = jnp.dot(a_ref[...], hw, preferred_element_type=jnp.float32)
    h = jnp.maximum(agg + bg3_ref[...], 0.0)
    out_ref[...] = jnp.dot(h.astype(bf16), w2_ref[...],
                           preferred_element_type=jnp.float32) + b2_ref[...]


def _fused_forward(x, a_hat, params, n, n_pad, vmem_limit):
    bf16 = jnp.bfloat16
    # NOTE: correctness of zero-padded rows relies on the padded *columns* of
    # A being zero, so relu(bias) junk in padded rows never reaches real rows.
    x_p = jnp.zeros((n_pad, FEATURES), bf16).at[:n].set(x.astype(bf16))
    a_p = jnp.zeros((n_pad, n_pad), bf16).at[:n, :n].set(a_hat.astype(bf16))

    w1 = params["w1"].astype(bf16)
    wg1 = params["wg1"].astype(bf16)
    wg2 = params["wg2"].astype(bf16)
    wg3 = params["wg3"].astype(bf16)
    b1 = params["b1"].reshape(1, HIDDEN).astype(jnp.float32)
    bg1 = params["bg1"].reshape(1, HIDDEN).astype(jnp.float32)
    bg2 = params["bg2"].reshape(1, HIDDEN).astype(jnp.float32)
    bg3 = params["bg3"].reshape(1, HIDDEN).astype(jnp.float32)
    w2_pad = jnp.zeros((HIDDEN, OUT_PAD), bf16).at[:, :OUT_DIM].set(
        params["w2"].astype(bf16))
    b2_pad = jnp.zeros((1, OUT_PAD), jnp.float32).at[:, :OUT_DIM].set(
        params["b2"].reshape(1, OUT_DIM).astype(jnp.float32))

    def full(shape):
        return pl.BlockSpec(shape, lambda i, _z=(0,) * len(shape): _z)

    flops = (2 * n_pad * FEATURES * HIDDEN + 4 * 2 * n_pad * HIDDEN * HIDDEN
             + 3 * 2 * n_pad * n_pad * HIDDEN + 2 * n_pad * HIDDEN * OUT_PAD)
    bytes_acc = (n_pad * n_pad * 2 + n_pad * FEATURES * 2
                 + 4 * HIDDEN * HIDDEN * 2 + HIDDEN * OUT_PAD * 2
                 + n_pad * OUT_PAD * 4)

    y = pl.pallas_call(
        _fused_kernel,
        out_shape=jax.ShapeDtypeStruct((n_pad, OUT_PAD), jnp.float32),
        grid_spec=pltpu.PrefetchScalarGridSpec(
            num_scalar_prefetch=0,
            grid=(1,),
            in_specs=[
                full((n_pad, FEATURES)),
                full((n_pad, n_pad)),
                full((FEATURES, HIDDEN)),
                full((1, HIDDEN)),
                full((HIDDEN, HIDDEN)),
                full((1, HIDDEN)),
                full((HIDDEN, HIDDEN)),
                full((1, HIDDEN)),
                full((HIDDEN, HIDDEN)),
                full((1, HIDDEN)),
                full((HIDDEN, OUT_PAD)),
                full((1, OUT_PAD)),
            ],
            out_specs=full((n_pad, OUT_PAD)),
        ),
        compiler_params=pltpu.CompilerParams(
            dimension_semantics=("arbitrary",),
            vmem_limit_bytes=vmem_limit),
        cost_estimate=pl.CostEstimate(flops=flops, transcendentals=0,
                                      bytes_accessed=bytes_acc),
    )(x_p, a_p, w1, b1, wg1, bg1, wg2, bg2, wg3, bg3, w2_pad, b2_pad)
    return y[:n, :OUT_DIM]


# ----------------------------------------------------------------------------
# tiled path (row + K tiling, f32 accumulator) for graphs too big to fuse
# ----------------------------------------------------------------------------
def _gcn_mid_tiled_kernel(a_ref, hw_ref, b_ref, wnext_ref, out_ref, acc_ref):
    @pl.when(pl.program_id(1) == 0)
    def _():
        acc_ref[...] = jnp.zeros_like(acc_ref)

    acc_ref[...] += jnp.dot(a_ref[...], hw_ref[...],
                            preferred_element_type=jnp.float32)

    @pl.when(pl.program_id(1) == pl.num_programs(1) - 1)
    def _():
        h = jnp.maximum(acc_ref[...] + b_ref[...], 0.0)           # f32 epilogue
        out_ref[...] = jnp.dot(h.astype(jnp.bfloat16), wnext_ref[...],
                               preferred_element_type=jnp.float32
                               ).astype(jnp.bfloat16)


def _gcn_last_tiled_kernel(a_ref, hw_ref, b_ref, w2_ref, b2_ref,
                           out_ref, acc_ref):
    @pl.when(pl.program_id(1) == 0)
    def _():
        acc_ref[...] = jnp.zeros_like(acc_ref)

    acc_ref[...] += jnp.dot(a_ref[...], hw_ref[...],
                            preferred_element_type=jnp.float32)

    @pl.when(pl.program_id(1) == pl.num_programs(1) - 1)
    def _():
        h = jnp.maximum(acc_ref[...] + b_ref[...], 0.0)
        out_ref[...] = jnp.dot(h.astype(jnp.bfloat16), w2_ref[...],
                               preferred_element_type=jnp.float32) + b2_ref[...]


def _full2(shape):
    return pl.BlockSpec(shape, lambda i, k, _z=(0,) * len(shape): _z)


def _gcn_mid_tiled_call(a_p, hw, b_pad, wnext_pad, n_pad, tile_m, tile_k,
                        vmem_limit):
    flops = 2 * n_pad * n_pad * HW_PAD + 2 * n_pad * HW_PAD * HW_PAD
    bytes_acc = (n_pad * n_pad * 2 + 2 * n_pad * HW_PAD * 2
                 + HW_PAD * HW_PAD * 2 + HW_PAD * 4)
    return pl.pallas_call(
        _gcn_mid_tiled_kernel,
        out_shape=jax.ShapeDtypeStruct((n_pad, HW_PAD), jnp.bfloat16),
        grid_spec=pltpu.PrefetchScalarGridSpec(
            num_scalar_prefetch=0,
            grid=(n_pad // tile_m, n_pad // tile_k),
            in_specs=[
                pl.BlockSpec((tile_m, tile_k), lambda i, k: (i, k)),   # A tile
                pl.BlockSpec((tile_k, HW_PAD), lambda i, k: (k, 0)),   # hw tile
                _full2((1, HW_PAD)),
                _full2((HW_PAD, HW_PAD)),
            ],
            out_specs=pl.BlockSpec((tile_m, HW_PAD), lambda i, k: (i, 0)),
            scratch_shapes=[pltpu.VMEM((tile_m, HW_PAD), jnp.float32)],
        ),
        compiler_params=pltpu.CompilerParams(
            dimension_semantics=("parallel", "arbitrary"),
            vmem_limit_bytes=vmem_limit),
        cost_estimate=pl.CostEstimate(flops=flops, transcendentals=0,
                                      bytes_accessed=bytes_acc),
    )(a_p, hw, b_pad, wnext_pad)


def _gcn_last_tiled_call(a_p, hw, b_pad, w2_pad, b2_pad, n_pad, tile_m, tile_k,
                         vmem_limit):
    flops = 2 * n_pad * n_pad * HW_PAD + 2 * n_pad * HW_PAD * OUT_PAD
    bytes_acc = (n_pad * n_pad * 2 + n_pad * HW_PAD * 2
                 + HW_PAD * OUT_PAD * 2 + OUT_PAD * 4 + n_pad * OUT_PAD * 4)
    return pl.pallas_call(
        _gcn_last_tiled_kernel,
        out_shape=jax.ShapeDtypeStruct((n_pad, OUT_PAD), jnp.float32),
        grid_spec=pltpu.PrefetchScalarGridSpec(
            num_scalar_prefetch=0,
            grid=(n_pad // tile_m, n_pad // tile_k),
            in_specs=[
                pl.BlockSpec((tile_m, tile_k), lambda i, k: (i, k)),
                pl.BlockSpec((tile_k, HW_PAD), lambda i, k: (k, 0)),
                _full2((1, HW_PAD)),
                _full2((HW_PAD, OUT_PAD)),
                _full2((1, OUT_PAD)),
            ],
            out_specs=pl.BlockSpec((tile_m, OUT_PAD), lambda i, k: (i, 0)),
            scratch_shapes=[pltpu.VMEM((tile_m, OUT_PAD), jnp.float32)],
        ),
        compiler_params=pltpu.CompilerParams(
            dimension_semantics=("parallel", "arbitrary"),
            vmem_limit_bytes=vmem_limit),
        cost_estimate=pl.CostEstimate(flops=flops, transcendentals=0,
                                      bytes_accessed=bytes_acc),
    )(a_p, hw, b_pad, w2_pad, b2_pad)


def _tiled_forward(x, a_hat, params, n, tile_m, tile_k, vmem_limit):
    bf16 = jnp.bfloat16
    step = math.lcm(tile_m, tile_k)
    n_pad = _round_up(max(n, step), step)

    # padded columns of A are zero -> padded-row relu(bias) junk never
    # propagates into real rows; final padded rows are sliced off.
    a_p = jnp.zeros((n_pad, n_pad), bf16).at[:n, :n].set(a_hat.astype(bf16))

    # fc1 + ReLU + pre-applied Wg1 are tiny row-local ops (K=4 / K=32): plain
    # jnp in the wrapper — a dedicated pallas_call is pure launch overhead.
    w1 = params["w1"].astype(bf16)
    b1 = params["b1"].reshape(1, HIDDEN).astype(jnp.float32)
    wg1_pad = jnp.zeros((HIDDEN, HW_PAD), bf16).at[:, :HIDDEN].set(
        params["wg1"].astype(bf16))
    h0 = jnp.maximum(
        jnp.dot(x.astype(bf16), w1, preferred_element_type=jnp.float32) + b1,
        0.0)
    hw1 = jnp.dot(h0.astype(bf16), wg1_pad,
                  preferred_element_type=jnp.float32).astype(bf16)
    hw1_p = jnp.zeros((n_pad, HW_PAD), bf16).at[:n].set(hw1)

    def pad_w(w):    # (HIDDEN, HIDDEN) -> lane/sublane-dense (HW_PAD, HW_PAD)
        return jnp.zeros((HW_PAD, HW_PAD), bf16).at[:HIDDEN, :HIDDEN].set(
            w.astype(bf16))

    def pad_b(b, width):
        return jnp.zeros((1, width), jnp.float32).at[:, :b.shape[0]].set(
            b.astype(jnp.float32))

    wg2_p = pad_w(params["wg2"])
    wg3_p = pad_w(params["wg3"])
    bg1_p = pad_b(params["bg1"], HW_PAD)
    bg2_p = pad_b(params["bg2"], HW_PAD)
    bg3_p = pad_b(params["bg3"], HW_PAD)
    w2_p = jnp.zeros((HW_PAD, OUT_PAD), bf16).at[:HIDDEN, :OUT_DIM].set(
        params["w2"].astype(bf16))
    b2_p = pad_b(params["b2"], OUT_PAD)

    hw2 = _gcn_mid_tiled_call(a_p, hw1_p, bg1_p, wg2_p, n_pad, tile_m, tile_k,
                              vmem_limit)
    hw3 = _gcn_mid_tiled_call(a_p, hw2, bg2_p, wg3_p, n_pad, tile_m, tile_k,
                              vmem_limit)
    y = _gcn_last_tiled_call(a_p, hw3, bg3_p, w2_p, b2_p, n_pad, tile_m,
                             tile_k, vmem_limit)
    return y[:n, :OUT_DIM]


# ----------------------------------------------------------------------------
# full forward
# ----------------------------------------------------------------------------
def net_forward(x, a_hat, params, *, tile_m=None, tile_k=None,
                force_tiled=False):
    n = x.shape[0]
    vmem_limit, fused_cap, tm_def, tk_def = _budgets()
    tile_m = tile_m or tm_def
    tile_k = tile_k or tk_def
    n_pad = _round_up(n, 16)   # bf16 sublane packing
    if (not force_tiled) and n_pad <= fused_cap:
        return _fused_forward(x, a_hat, params, n, n_pad, vmem_limit)
    return _tiled_forward(x, a_hat, params, n, tile_m, tile_k, vmem_limit)


# ----------------------------------------------------------------------------
# graph preprocessing / params / reference
# ----------------------------------------------------------------------------
def make_gcn_adjacency(edge_index, num_nodes):
    """Dense A_hat = D^{-1/2}(A + I)D^{-1/2} following PyG gcn_norm semantics:
    duplicate edges scatter-add; self-loops only added where missing."""
    src, dst = edge_index[0], edge_index[1]
    adj = jnp.zeros((num_nodes, num_nodes), jnp.float32)
    adj = adj.at[dst, src].add(1.0)                       # message: src -> dst
    has_self = jnp.diag(adj) > 0
    adj = adj + jnp.diag(jnp.where(has_self, 0.0, 1.0))   # remaining self-loops
    deg = adj.sum(axis=1)
    d_inv_sqrt = jnp.where(deg > 0, 1.0 / jnp.sqrt(deg), 0.0)
    return d_inv_sqrt[:, None] * adj * d_inv_sqrt[None, :]


def init_params(key):
    ks = jax.random.split(key, 10)

    def lin(kw, fan_in, fan_out):
        bound = 1.0 / jnp.sqrt(fan_in)
        return jax.random.uniform(kw, (fan_in, fan_out), jnp.float32,
                                  -bound, bound)

    return {
        "w1": lin(ks[0], FEATURES, HIDDEN),
        "b1": jax.random.uniform(ks[1], (HIDDEN,), jnp.float32,
                                 -1.0 / jnp.sqrt(FEATURES),
                                 1.0 / jnp.sqrt(FEATURES)),
        "wg1": lin(ks[2], HIDDEN, HIDDEN),
        "bg1": jnp.zeros((HIDDEN,), jnp.float32),
        "wg2": lin(ks[3], HIDDEN, HIDDEN),
        "bg2": jnp.zeros((HIDDEN,), jnp.float32),
        "wg3": lin(ks[4], HIDDEN, HIDDEN),
        "bg3": jnp.zeros((HIDDEN,), jnp.float32),
        "w2": lin(ks[5], HIDDEN, OUT_DIM),
        "b2": jax.random.uniform(ks[6], (OUT_DIM,), jnp.float32,
                                 -1.0 / jnp.sqrt(HIDDEN),
                                 1.0 / jnp.sqrt(HIDDEN)),
    }


def reference_forward(x, a_hat, params):
    """Pure-JAX reference using the same bf16-input / f32-accumulate matmuls."""
    bf16 = jnp.bfloat16

    def mm(a, b):
        return jnp.dot(a.astype(bf16), b.astype(bf16),
                       preferred_element_type=jnp.float32)

    h = jnp.maximum(mm(x, params["w1"]) + params["b1"], 0.0)
    for wk, bk in (("wg1", "bg1"), ("wg2", "bg2"), ("wg3", "bg3")):
        hw = mm(h, params[wk])
        h = jnp.maximum(mm(a_hat, hw) + params[bk], 0.0)
    return mm(h, params["w2"]) + params["b2"]


# ----------------------------------------------------------------------------
if __name__ == "__main__":
    key = jax.random.PRNGKey(0)
    k_x, k_e, k_p, k_x2, k_e2 = jax.random.split(key, 5)
    params = init_params(k_p)

    # ---- Test 1: small graph (N=16) -> fully fused single-kernel path -----
    n1, e1 = 16, 32
    x1 = jax.random.normal(k_x, (n1, FEATURES), jnp.float32)
    src = jax.random.randint(k_e, (e1,), 0, n1)
    dst = jax.random.randint(jax.random.fold_in(k_e, 1), (e1,), 0, n1)
    edge_index1 = jnp.stack(
        [jnp.concatenate([src, dst]), jnp.concatenate([dst, src])], axis=0)
    a_hat1 = make_gcn_adjacency(edge_index1, n1)

    out1 = jax.block_until_ready(jax.jit(net_forward)(x1, a_hat1, params))
    ref1 = reference_forward(x1, a_hat1, params)
    assert out1.shape == (n1, OUT_DIM)
    assert jnp.allclose(out1, ref1, atol=1e-2, rtol=1e-2), float(
        jnp.max(jnp.abs(out1 - ref1)))

    # ---- Test 2: larger graph forced through the row+K tiled path ---------
    n2, e2 = 384, 2048
    x2 = jax.random.normal(k_x2, (n2, FEATURES), jnp.float32)
    src2 = jax.random.randint(k_e2, (e2,), 0, n2)
    dst2 = jax.random.randint(jax.random.fold_in(k_e2, 1), (e2,), 0, n2)
    edge_index2 = jnp.stack(
        [jnp.concatenate([src2, dst2]), jnp.concatenate([dst2, src2])], axis=0)
    a_hat2 = make_gcn_adjacency(edge_index2, n2)

    tiled_fwd = jax.jit(functools.partial(
        net_forward, force_tiled=True, tile_m=128, tile_k=128))
    out2 = jax.block_until_ready(tiled_fwd(x2, a_hat2, params))
    ref2 = reference_forward(x2, a_hat2, params)
    assert out2.shape == (n2, OUT_DIM)
    assert jnp.allclose(out2, ref2, atol=2e-2, rtol=2e-2), float(
        jnp.max(jnp.abs(out2 - ref2)))

    print("KERNEL_OK")
</pallas_src>

<mosaic_0001>
module attributes {stable_mosaic.version = 11 : i64} {
  func.func @_fused_kernel(%arg0: i32, %arg1: memref<16x4xbf16, #tpu.memory_space<vmem>>, %arg2: memref<16x16xbf16, #tpu.memory_space<vmem>>, %arg3: memref<4x32xbf16, #tpu.memory_space<vmem>>, %arg4: memref<1x32xf32, #tpu.memory_space<vmem>>, %arg5: memref<32x32xbf16, #tpu.memory_space<vmem>>, %arg6: memref<1x32xf32, #tpu.memory_space<vmem>>, %arg7: memref<32x32xbf16, #tpu.memory_space<vmem>>, %arg8: memref<1x32xf32, #tpu.memory_space<vmem>>, %arg9: memref<32x32xbf16, #tpu.memory_space<vmem>>, %arg10: memref<1x32xf32, #tpu.memory_space<vmem>>, %arg11: memref<32x128xbf16, #tpu.memory_space<vmem>>, %arg12: memref<1x128xf32, #tpu.memory_space<vmem>>, %arg13: memref<16x128xf32, #tpu.memory_space<vmem>>) attributes {dimension_semantics = [#tpu.dimension_semantics<arbitrary>], iteration_bounds = array<i64: 1>, scalar_prefetch = 0 : i64, scratch_operands = 0 : i64, tpu.core_type = #tpu.core_type<tc>, window_params = [{pipeline_mode = #tpu.pipeline_mode<synchronous>, transform_indices = @transform_0, window_bounds = array<i64: 16, 4>}, {pipeline_mode = #tpu.pipeline_mode<synchronous>, transform_indices = @transform_1, window_bounds = array<i64: 16, 16>}, {pipeline_mode = #tpu.pipeline_mode<synchronous>, transform_indices = @transform_2, window_bounds = array<i64: 4, 32>}, {pipeline_mode = #tpu.pipeline_mode<synchronous>, transform_indices = @transform_3, window_bounds = array<i64: 1, 32>}, {pipeline_mode = #tpu.pipeline_mode<synchronous>, transform_indices = @transform_4, window_bounds = array<i64: 32, 32>}, {pipeline_mode = #tpu.pipeline_mode<synchronous>, transform_indices = @transform_5, window_bounds = array<i64: 1, 32>}, {pipeline_mode = #tpu.pipeline_mode<synchronous>, transform_indices = @transform_6, window_bounds = array<i64: 32, 32>}, {pipeline_mode = #tpu.pipeline_mode<synchronous>, transform_indices = @transform_7, window_bounds = array<i64: 1, 32>}, {pipeline_mode = #tpu.pipeline_mode<synchronous>, transform_indices = @transform_8, window_bounds = array<i64: 32, 32>}, {pipeline_mode = #tpu.pipeline_mode<synchronous>, transform_indices = @transform_9, window_bounds = array<i64: 1, 32>}, {pipeline_mode = #tpu.pipeline_mode<synchronous>, transform_indices = @transform_10, window_bounds = array<i64: 32, 128>}, {pipeline_mode = #tpu.pipeline_mode<synchronous>, transform_indices = @transform_11, window_bounds = array<i64: 1, 128>}, {pipeline_mode = #tpu.pipeline_mode<synchronous>, transform_indices = @transform_12, window_bounds = array<i64: 16, 128>}]} {
    %c0 = arith.constant 0 : index
    %c0_0 = arith.constant 0 : index
    %0 = vector.load %arg1[%c0, %c0_0] : memref<16x4xbf16, #tpu.memory_space<vmem>>, vector<16x4xbf16>
    %c0_1 = arith.constant 0 : index
    %c0_2 = arith.constant 0 : index
    %1 = vector.load %arg3[%c0_1, %c0_2] : memref<4x32xbf16, #tpu.memory_space<vmem>>, vector<4x32xbf16>
    %cst = arith.constant dense<0.000000e+00> : vector<16x32xf32>
    %2 = tpu.matmul %0, %1, %cst {dimension_numbers = #tpu.dot_dimension_numbers<[1], [0], [0], [1], [0, 0, 1, 1], [], []>} : vector<16x4xbf16>, vector<4x32xbf16>, vector<16x32xf32> -> vector<16x32xf32>
    %c0_3 = arith.constant 0 : index
    %c0_4 = arith.constant 0 : index
    %3 = vector.load %arg4[%c0_3, %c0_4] : memref<1x32xf32, #tpu.memory_space<vmem>>, vector<1x32xf32>
    %4 = vector.broadcast %3 : vector<1x32xf32> to vector<16x32xf32>
    %5 = arith.addf %2, %4 : vector<16x32xf32>
    %cst_5 = arith.constant 0.000000e+00 : f32
    %6 = vector.broadcast %cst_5 : f32 to vector<16x32xf32>
    %7 = arith.maximumf %5, %6 : vector<16x32xf32>
    %8 = arith.truncf %7 : vector<16x32xf32> to vector<16x32xbf16>
    %c0_6 = arith.constant 0 : index
    %c0_7 = arith.constant 0 : index
    %9 = vector.load %arg5[%c0_6, %c0_7] : memref<32x32xbf16, #tpu.memory_space<vmem>>, vector<32x32xbf16>
    %cst_8 = arith.constant dense<0.000000e+00> : vector<16x32xf32>
    %10 = tpu.matmul %8, %9, %cst_8 {dimension_numbers = #tpu.dot_dimension_numbers<[1], [0], [0], [1], [0, 0, 1, 1], [], []>} : vector<16x32xbf16>, vector<32x32xbf16>, vector<16x32xf32> -> vector<16x32xf32>
    %11 = arith.truncf %10 : vector<16x32xf32> to vector<16x32xbf16>
    %c0_9 = arith.constant 0 : index
    %c0_10 = arith.constant 0 : index
    %12 = vector.load %arg2[%c0_9, %c0_10] : memref<16x16xbf16, #tpu.memory_space<vmem>>, vector<16x16xbf16>
    %cst_11 = arith.constant dense<0.000000e+00> : vector<16x32xf32>
    %13 = tpu.matmul %12, %11, %cst_11 {dimension_numbers = #tpu.dot_dimension_numbers<[1], [0], [0], [1], [0, 0, 1, 1], [], []>} : vector<16x16xbf16>, vector<16x32xbf16>, vector<16x32xf32> -> vector<16x32xf32>
    %c0_12 = arith.constant 0 : index
    %c0_13 = arith.constant 0 : index
    %14 = vector.load %arg6[%c0_12, %c0_13] : memref<1x32xf32, #tpu.memory_space<vmem>>, vector<1x32xf32>
    %15 = vector.broadcast %14 : vector<1x32xf32> to vector<16x32xf32>
    %16 = arith.addf %13, %15 : vector<16x32xf32>
    %cst_14 = arith.constant 0.000000e+00 : f32
    %17 = vector.broadcast %cst_14 : f32 to vector<16x32xf32>
    %18 = arith.maximumf %16, %17 : vector<16x32xf32>
    %19 = arith.truncf %18 : vector<16x32xf32> to vector<16x32xbf16>
    %c0_15 = arith.constant 0 : index
    %c0_16 = arith.constant 0 : index
    %20 = vector.load %arg7[%c0_15, %c0_16] : memref<32x32xbf16, #tpu.memory_space<vmem>>, vector<32x32xbf16>
    %cst_17 = arith.constant dense<0.000000e+00> : vector<16x32xf32>
    %21 = tpu.matmul %19, %20, %cst_17 {dimension_numbers = #tpu.dot_dimension_numbers<[1], [0], [0], [1], [0, 0, 1, 1], [], []>} : vector<16x32xbf16>, vector<32x32xbf16>, vector<16x32xf32> -> vector<16x32xf32>
    %22 = arith.truncf %21 : vector<16x32xf32> to vector<16x32xbf16>
    %c0_18 = arith.constant 0 : index
    %c0_19 = arith.constant 0 : index
    %23 = vector.load %arg2[%c0_18, %c0_19] : memref<16x16xbf16, #tpu.memory_space<vmem>>, vector<16x16xbf16>
    %cst_20 = arith.constant dense<0.000000e+00> : vector<16x32xf32>
    %24 = tpu.matmul %23, %22, %cst_20 {dimension_numbers = #tpu.dot_dimension_numbers<[1], [0], [0], [1], [0, 0, 1, 1], [], []>} : vector<16x16xbf16>, vector<16x32xbf16>, vector<16x32xf32> -> vector<16x32xf32>
    %c0_21 = arith.constant 0 : index
    %c0_22 = arith.constant 0 : index
    %25 = vector.load %arg8[%c0_21, %c0_22] : memref<1x32xf32, #tpu.memory_space<vmem>>, vector<1x32xf32>
    %26 = vector.broadcast %25 : vector<1x32xf32> to vector<16x32xf32>
    %27 = arith.addf %24, %26 : vector<16x32xf32>
    %cst_23 = arith.constant 0.000000e+00 : f32
    %28 = vector.broadcast %cst_23 : f32 to vector<16x32xf32>
    %29 = arith.maximumf %27, %28 : vector<16x32xf32>
    %30 = arith.truncf %29 : vector<16x32xf32> to vector<16x32xbf16>
    %c0_24 = arith.constant 0 : index
    %c0_25 = arith.constant 0 : index
    %31 = vector.load %arg9[%c0_24, %c0_25] : memref<32x32xbf16, #tpu.memory_space<vmem>>, vector<32x32xbf16>
    %cst_26 = arith.constant dense<0.000000e+00> : vector<16x32xf32>
    %32 = tpu.matmul %30, %31, %cst_26 {dimension_numbers = #tpu.dot_dimension_numbers<[1], [0], [0], [1], [0, 0, 1, 1], [], []>} : vector<16x32xbf16>, vector<32x32xbf16>, vector<16x32xf32> -> vector<16x32xf32>
    %33 = arith.truncf %32 : vector<16x32xf32> to vector<16x32xbf16>
    %c0_27 = arith.constant 0 : index
    %c0_28 = arith.constant 0 : index
    %34 = vector.load %arg2[%c0_27, %c0_28] : memref<16x16xbf16, #tpu.memory_space<vmem>>, vector<16x16xbf16>
    %cst_29 = arith.constant dense<0.000000e+00> : vector<16x32xf32>
    %35 = tpu.matmul %34, %33, %cst_29 {dimension_numbers = #tpu.dot_dimension_numbers<[1], [0], [0], [1], [0, 0, 1, 1], [], []>} : vector<16x16xbf16>, vector<16x32xbf16>, vector<16x32xf32> -> vector<16x32xf32>
    %c0_30 = arith.constant 0 : index
    %c0_31 = arith.constant 0 : index
    %36 = vector.load %arg10[%c0_30, %c0_31] : memref<1x32xf32, #tpu.memory_space<vmem>>, vector<1x32xf32>
    %37 = vector.broadcast %36 : vector<1x32xf32> to vector<16x32xf32>
    %38 = arith.addf %35, %37 : vector<16x32xf32>
    %cst_32 = arith.constant 0.000000e+00 : f32
    %39 = vector.broadcast %cst_32 : f32 to vector<16x32xf32>
    %40 = arith.maximumf %38, %39 : vector<16x32xf32>
    %41 = arith.truncf %40 : vector<16x32xf32> to vector<16x32xbf16>
    %c0_33 = arith.constant 0 : index
    %c0_34 = arith.constant 0 : index
    %42 = vector.load %arg11[%c0_33, %c0_34] : memref<32x128xbf16, #tpu.memory_space<vmem>>, vector<32x128xbf16>
    %cst_35 = arith.constant dense<0.000000e+00> : vector<16x128xf32>
    %43 = tpu.matmul %41, %42, %cst_35 {dimension_numbers = #tpu.dot_dimension_numbers<[1], [0], [0], [1], [0, 0, 1, 1], [], []>} : vector<16x32xbf16>, vector<32x128xbf16>, vector<16x128xf32> -> vector<16x128xf32>
    %c0_36 = arith.constant 0 : index
    %c0_37 = arith.constant 0 : index
    %44 = vector.load %arg12[%c0_36, %c0_37] : memref<1x128xf32, #tpu.memory_space<vmem>>, vector<1x128xf32>
    %45 = vector.broadcast %44 : vector<1x128xf32> to vector<16x128xf32>
    %46 = arith.addf %43, %45 : vector<16x128xf32>
    %c0_38 = arith.constant 0 : index
    %c0_39 = arith.constant 0 : index
    %47 = vector.load %arg13[%c0_38, %c0_39] : memref<16x128xf32, #tpu.memory_space<vmem>>, vector<16x128xf32>
    tpu.vector_store %arg13[%c0_38, %c0_39], %46 {strides = array<i32>} : memref<16x128xf32, #tpu.memory_space<vmem>>, vector<16x128xf32>,
    return
  }
  func.func @transform_0(%arg0: i32) -> (i32, i32) {
    %c0_i32 = arith.constant 0 : i32
    %c0_i32_0 = arith.constant 0 : i32
    %c0_i32_1 = arith.constant 0 : i32
    return %c0_i32, %c0_i32_0 : i32, i32
  }
  func.func @transform_1(%arg0: i32) -> (i32, i32) {
    %c0_i32 = arith.constant 0 : i32
    %c0_i32_0 = arith.constant 0 : i32
    %c0_i32_1 = arith.constant 0 : i32
    return %c0_i32, %c0_i32_0 : i32, i32
  }
  func.func @transform_2(%arg0: i32) -> (i32, i32) {
    %c0_i32 = arith.constant 0 : i32
    %c0_i32_0 = arith.constant 0 : i32
    %c0_i32_1 = arith.constant 0 : i32
    return %c0_i32, %c0_i32_0 : i32, i32
  }
  func.func @transform_3(%arg0: i32) -> (i32, i32) {
    %c0_i32 = arith.constant 0 : i32
    %c0_i32_0 = arith.constant 0 : i32
    %c0_i32_1 = arith.constant 0 : i32
    return %c0_i32, %c0_i32_0 : i32, i32
  }
  func.func @transform_4(%arg0: i32) -> (i32, i32) {
    %c0_i32 = arith.constant 0 : i32
    %c0_i32_0 = arith.constant 0 : i32
    %c0_i32_1 = arith.constant 0 : i32
    return %c0_i32, %c0_i32_0 : i32, i32
  }
  func.func @transform_5(%arg0: i32) -> (i32, i32) {
    %c0_i32 = arith.constant 0 : i32
    %c0_i32_0 = arith.constant 0 : i32
    %c0_i32_1 = arith.constant 0 : i32
    return %c0_i32, %c0_i32_0 : i32, i32
  }
  func.func @transform_6(%arg0: i32) -> (i32, i32) {
    %c0_i32 = arith.constant 0 : i32
    %c0_i32_0 = arith.constant 0 : i32
    %c0_i32_1 = arith.constant 0 : i32
    return %c0_i32, %c0_i32_0 : i32, i32
  }
  func.func @transform_7(%arg0: i32) -> (i32, i32) {
    %c0_i32 = arith.constant 0 : i32
    %c0_i32_0 = arith.constant 0 : i32
    %c0_i32_1 = arith.constant 0 : i32
    return %c0_i32, %c0_i32_0 : i32, i32
  }
  func.func @transform_8(%arg0: i32) -> (i32, i32) {
    %c0_i32 = arith.constant 0 : i32
    %c0_i32_0 = arith.constant 0 : i32
    %c0_i32_1 = arith.constant 0 : i32
    return %c0_i32, %c0_i32_0 : i32, i32
  }
  func.func @transform_9(%arg0: i32) -> (i32, i32) {
    %c0_i32 = arith.constant 0 : i32
    %c0_i32_0 = arith.constant 0 : i32
    %c0_i32_1 = arith.constant 0 : i32
    return %c0_i32, %c0_i32_0 : i32, i32
  }
  func.func @transform_10(%arg0: i32) -> (i32, i32) {
    %c0_i32 = arith.constant 0 : i32
    %c0_i32_0 = arith.constant 0 : i32
    %c0_i32_1 = arith.constant 0 : i32
    return %c0_i32, %c0_i32_0 : i32, i32
  }
  func.func @transform_11(%arg0: i32) -> (i32, i32) {
    %c0_i32 = arith.constant 0 : i32
    %c0_i32_0 = arith.constant 0 : i32
    %c0_i32_1 = arith.constant 0 : i32
    return %c0_i32, %c0_i32_0 : i32, i32
  }
  func.func @transform_12(%arg0: i32) -> (i32, i32) {
    %c0_i32 = arith.constant 0 : i32
    %c0_i32_0 = arith.constant 0 : i32
    %c0_i32_1 = arith.constant 0 : i32
    return %c0_i32, %c0_i32_0 : i32, i32
  }
}

</mosaic_0001>

<llo_original>
// kernel: net_forward.1
$region0: #{net_forward.1}
  #allocation0 [shape = 'u32[]', space=smem, size = 0x4, offset = 0x4, fixed_abs, tag = 'smem constant byte address 0x4 - core index']
  #allocation1 [shape = 'u32[144,128]{1,0:T(1,128)}', space=vmem, size = 0x12000, scoped, tag = 'internal scratch']
  %s0 = inlined_call_operand.vmem [shape: bf16[16,4], index: 0, kind: input, shape index: {}]
  %s1 = inlined_call_operand.vmem [shape: bf16[16,16], index: 1, kind: input, shape index: {}]
  %s2 = inlined_call_operand.vmem [shape: bf16[4,32], index: 2, kind: input, shape index: {}]
  %s3 = inlined_call_operand.vmem [shape: f32[1,32], index: 3, kind: input, shape index: {}]
  %s4 = inlined_call_operand.vmem [shape: bf16[32,32], index: 4, kind: input, shape index: {}]
  %s5 = inlined_call_operand.vmem [shape: f32[1,32], index: 5, kind: input, shape index: {}]
  %s6 = inlined_call_operand.vmem [shape: bf16[32,32], index: 6, kind: input, shape index: {}]
  %s7 = inlined_call_operand.vmem [shape: f32[1,32], index: 7, kind: input, shape index: {}]
  %s8 = inlined_call_operand.vmem [shape: bf16[32,32], index: 8, kind: input, shape index: {}]
  %s9 = inlined_call_operand.vmem [shape: f32[1,32], index: 9, kind: input, shape index: {}]
  %s10 = inlined_call_operand.vmem [shape: bf16[32,128], index: 10, kind: input, shape index: {}]
  %s11 = inlined_call_operand.vmem [shape: f32[1,128], index: 11, kind: input, shape index: {}]
  %s12 = inlined_call_operand.vmem [shape: f32[16,128], index: 12, kind: output, shape index: {}]
  %s13 = sld [smem:[#allocation0]]
  $region58: #{net_forward.1} parent=0
    _
  %s15 = ssub.s32 1, %s13
  %s16 = scalar_select 0, %s15, %s13
  // Predicated region
  $region2: #{net_forward.1} parent=0 // pred_check
    _
  $region3: #{net_forward.1} parent=0 // pred_check_branch
    %18 = sbr.rel (0) target = $region5
  $region4: #{net_forward.1} parent=0 // pred_region
    _
  $region5: #{net_forward.1} parent=0 // pred_fallthru
    _
  // Predicated region
  $region6: #{net_forward.1} parent=0 // pred_check
    _
  $region7: #{net_forward.1} parent=0 // pred_check_branch
    %20 = sbr.rel (0) target = $region9
  $region8: #{net_forward.1} parent=0 // pred_region
    _
  $region9: #{net_forward.1} parent=0 // pred_fallthru
    _
  // Predicated region
  $region10: #{net_forward.1} parent=0 // pred_check
    _
  $region11: #{net_forward.1} parent=0 // pred_check_branch
    %22 = sbr.rel (0) target = $region13
  $region12: #{net_forward.1} parent=0 // pred_region
    _
  $region13: #{net_forward.1} parent=0 // pred_fallthru
    _
  // Predicated region
  $region14: #{net_forward.1} parent=0 // pred_check
    _
  $region15: #{net_forward.1} parent=0 // pred_check_branch
    %24 = sbr.rel (0) target = $region17
  $region16: #{net_forward.1} parent=0 // pred_region
    _
  $region17: #{net_forward.1} parent=0 // pred_fallthru
    _
  // Predicated region
  $region18: #{net_forward.1} parent=0 // pred_check
    _
  $region19: #{net_forward.1} parent=0 // pred_check_branch
    %26 = sbr.rel (0) target = $region21
  $region20: #{net_forward.1} parent=0 // pred_region
    _
  $region21: #{net_forward.1} parent=0 // pred_fallthru
    _
  // Predicated region
  $region22: #{net_forward.1} parent=0 // pred_check
    _
  $region23: #{net_forward.1} parent=0 // pred_check_branch
    %28 = sbr.rel (0) target = $region25
  $region24: #{net_forward.1} parent=0 // pred_region
    _
  $region25: #{net_forward.1} parent=0 // pred_fallthru
    _
  // Predicated region
  $region26: #{net_forward.1} parent=0 // pred_check
    _
  $region27: #{net_forward.1} parent=0 // pred_check_branch
    %30 = sbr.rel (0) target = $region29
  $region28: #{net_forward.1} parent=0 // pred_region
    _
  $region29: #{net_forward.1} parent=0 // pred_fallthru
    _
  // Predicated region
  $region30: #{net_forward.1} parent=0 // pred_check
    _
  $region31: #{net_forward.1} parent=0 // pred_check_branch
    %32 = sbr.rel (0) target = $region33
  $region32: #{net_forward.1} parent=0 // pred_region
    _
  $region33: #{net_forward.1} parent=0 // pred_fallthru
    _
  // Predicated region
  $region34: #{net_forward.1} parent=0 // pred_check
    _
  $region35: #{net_forward.1} parent=0 // pred_check_branch
    %34 = sbr.rel (0) target = $region37
  $region36: #{net_forward.1} parent=0 // pred_region
    _
  $region37: #{net_forward.1} parent=0 // pred_fallthru
    _
  // Predicated region
  $region38: #{net_forward.1} parent=0 // pred_check
    _
  $region39: #{net_forward.1} parent=0 // pred_check_branch
    %36 = sbr.rel (0) target = $region41
  $region40: #{net_forward.1} parent=0 // pred_region
    _
  $region41: #{net_forward.1} parent=0 // pred_fallthru
    _
  // Predicated region
  $region42: #{net_forward.1} parent=0 // pred_check
    _
  $region43: #{net_forward.1} parent=0 // pred_check_branch
    %38 = sbr.rel (0) target = $region45
  $region44: #{net_forward.1} parent=0 // pred_region
    _
  $region45: #{net_forward.1} parent=0 // pred_fallthru
    _
  // Predicated region
  $region46: #{net_forward.1} parent=0 // pred_check
    _
  $region47: #{net_forward.1} parent=0 // pred_check_branch
    %40 = sbr.rel (0) target = $region49
  $region48: #{net_forward.1} parent=0 // pred_region
    _
  $region49: #{net_forward.1} parent=0 // pred_fallthru
    _
  %v42 = vld [vmem:[%s0] sm:$0xf]
  %v43 = vld [vmem:[%s0 + $0x4] sm:$0xf]
  %v44 = vld [vmem:[%s2] sm:$0x3]
  %v45 = vld [vmem:[%s3] sm:$0x1]
  %v47 = vlaneseq
  %v48 = vshrl.u32 %v47, 7
  %v49 = vsub.s32 0, %v48
  %v50 = vrot.slane %v45, %v49
  %v54 = vunpack.c.l.b16 %v42
  %v55 = vunpack.c.l.b16 %v43
  %v56 = vpack.c.b16 %v55, %v54
  %vm57 = vcmask 31744
  %v59 = vsel %vm57, %v56, 0
  %vm61 = vcmask 1041408
  %v63 = vsel %vm61, %v44, 0
  %65 = vmatprep.subr.bf16.mxu0 0
  %66 = vmatpush1.bf16.msra.mxu0 0
  %67 = vmatprep.subr.bf16.mxu0 0
  %68 = vmatpush1.bf16.msra.mxu0 0
  %69 = vmatprep.subr.bf16.mxu0 0
  %70 = vmatpush1.bf16.msra.mxu0 0
  %71 = vmatprep.subr.bf16.mxu0 0
  %72 = vmatpush1.bf16.msra.mxu0 0
  %73 = vmatprep.subr.bf16.mxu0 0
  %74 = vmatpush1.bf16.msra.mxu0 0
  %75 = vmatprep.subr.bf16.mxu0 0
  %76 = vmatpush1.bf16.msra.mxu0 0
  %77 = vmatprep.subr.bf16.mxu0 0
  %78 = vmatpush1.bf16.msra.mxu0 0
  %79 = vmatprep.subr.bf16.mxu0 0
  %80 = vmatpush1.bf16.msra.mxu0 %v63
  %81 = vmatprep.subr.bf16.mxu0 0
  %82 = vmatpush2.bf16.msra.mxu0 0
  %83 = vmatprep.subr.bf16.mxu0 0
  %84 = vmatpush2.bf16.msra.mxu0 0
  %85 = vmatprep.subr.bf16.mxu0 0
  %86 = vmatpush2.bf16.msra.mxu0 0
  %87 = vmatprep.subr.bf16.mxu0 0
  %88 = vmatpush2.bf16.msra.mxu0 0
  %89 = vmatprep.subr.bf16.mxu0 0
  %90 = vmatpush2.bf16.msra.mxu0 0
  %91 = vmatprep.subr.bf16.mxu0 0
  %92 = vmatpush2.bf16.msra.mxu0 0
  %93 = vmatprep.subr.bf16.mxu0 0
  %94 = vmatpush2.bf16.msra.mxu0 0
  %95 = vmatprep.subr.bf16.mxu0 0
  %96 = vmatpush2.bf16.msra.mxu0 0
  %97 = vmatprep.mubr.bf16.mxu0 0
  %98 = vmatmul.mubr.bf16.gmra.mxu0 %v59
  %v99 = vpop.f32.mrf.mxu0
  %v100 = vadd.f32 %v50, %v99
  %v101 = vpop.f32.mrf.mxu0
  %v102 = vpop.f32.mrf.mxu0
  %v103 = vadd.f32 %v50, %v102
  %v104 = vpop.f32.mrf.mxu0
  %105 = vdwg.mxu0
  %v106 = vmax.f32 %v100, 0.0
  %v107 = vmax.f32 %v103, 0.0
  %v108 = vpack.c.bf16 %v107, %v106
  %v109 = vld [vmem:[%s4] sm:$0xf]
  %v110 = vld [vmem:[%s4 + $0x4] sm:$0xf]
  %v111 = vld [vmem:[%s4 + $0x8] sm:$0xf]
  %v112 = vld [vmem:[%s4 + $0xc] sm:$0xf]
  %v117 = vunpack.c.l.b16 %v109
  %v118 = vunpack.c.l.b16 %v110
  %v119 = vunpack.c.l.b16 %v111
  %v120 = vunpack.c.l.b16 %v112
  %v121 = vpack.c.b16 %v118, %v117
  %v122 = vpack.c.b16 %v120, %v119
  %vm125 = vcmask 261120
  %v127 = vsel %vm125, %v108, 0
  %129 = vmatprep.subr.bf16.mxu0 0
  %130 = vmatpush1.bf16.msra.mxu0 0
  %131 = vmatprep.subr.bf16.mxu0 0
  %132 = vmatpush1.bf16.msra.mxu0 0
  %133 = vmatprep.subr.bf16.mxu0 0
  %134 = vmatpush1.bf16.msra.mxu0 0
  %135 = vmatprep.subr.bf16.mxu0 0
  %136 = vmatpush1.bf16.msra.mxu0 0
  %137 = vmatprep.subr.bf16.mxu0 0
  %138 = vmatpush1.bf16.msra.mxu0 0
  %139 = vmatprep.subr.bf16.mxu0 0
  %140 = vmatpush1.bf16.msra.mxu0 0
  %141 = vmatprep.subr.bf16.mxu0 0
  %142 = vmatpush1.bf16.msra.mxu0 %v122
  %143 = vmatprep.subr.bf16.mxu0 0
  %144 = vmatpush1.bf16.msra.mxu0 %v121
  %145 = vmatprep.subr.bf16.mxu0 0
  %146 = vmatpush2.bf16.msra.mxu0 0
  %147 = vmatprep.subr.bf16.mxu0 0
  %148 = vmatpush2.bf16.msra.mxu0 0
  %149 = vmatprep.subr.bf16.mxu0 0
  %150 = vmatpush2.bf16.msra.mxu0 0
  %151 = vmatprep.subr.bf16.mxu0 0
  %152 = vmatpush2.bf16.msra.mxu0 0
  %153 = vmatprep.subr.bf16.mxu0 0
  %154 = vmatpush2.bf16.msra.mxu0 0
  %155 = vmatprep.subr.bf16.mxu0 0
  %156 = vmatpush2.bf16.msra.mxu0 0
  %157 = vmatprep.subr.bf16.mxu0 0
  %158 = vmatpush2.bf16.msra.mxu0 0
  %159 = vmatprep.subr.bf16.mxu0 0
  %160 = vmatpush2.bf16.msra.mxu0 0
  %161 = vmatprep.mubr.bf16.mxu0 0
  %162 = vmatmul.mubr.bf16.gmra.mxu0 %v127
  %v163 = vpop.f32.mrf.mxu0
  %v164 = vadd.f32 0.0, %v163
  %v165 = vpop.f32.mrf.mxu0
  %v166 = vpop.f32.mrf.mxu0
  %v167 = vadd.f32 0.0, %v166
  %v168 = vpop.f32.mrf.mxu0
  %169 = vdwg.mxu0
  %v170 = vpack.c.bf16 %v167, %v164
  %v171 = vld [vmem:[%s1] sm:$0xf]
  %v172 = vld [vmem:[%s1 + $0x4] sm:$0xf]
  %v173 = vld [vmem:[%s5] sm:$0x1]
  %v175 = vlaneseq
  %v176 = vshrl.u32 %v175, 7
  %v177 = vsub.s32 0, %v176
  %v178 = vrot.slane %v173, %v177
  %v182 = vunpack.c.l.b16 %v171
  %v183 = vunpack.c.l.b16 %v172
  %v184 = vpack.c.b16 %v183, %v182
  %vm185 = vcmask 130048
  %v187 = vsel %vm185, %v184, 0
  %189 = vmatprep.subr.bf16.mxu0 0
  %190 = vmatpush1.bf16.msra.mxu0 0
  %191 = vmatprep.subr.bf16.mxu0 0
  %192 = vmatpush1.bf16.msra.mxu0 0
  %193 = vmatprep.subr.bf16.mxu0 0
  %194 = vmatpush1.bf16.msra.mxu0 0
  %195 = vmatprep.subr.bf16.mxu0 0
  %196 = vmatpush1.bf16.msra.mxu0 0
  %197 = vmatprep.subr.bf16.mxu0 0
  %198 = vmatpush1.bf16.msra.mxu0 0
  %199 = vmatprep.subr.bf16.mxu0 0
  %200 = vmatpush1.bf16.msra.mxu0 0
  %201 = vmatprep.subr.bf16.mxu0 0
  %202 = vmatpush1.bf16.msra.mxu0 0
  %203 = vmatprep.subr.bf16.mxu0 0
  %204 = vmatpush1.bf16.msra.mxu0 %v170
  %205 = vmatprep.subr.bf16.mxu0 0
  %206 = vmatpush2.bf16.msra.mxu0 0
  %207 = vmatprep.subr.bf16.mxu0 0
  %208 = vmatpush2.bf16.msra.mxu0 0
  %209 = vmatprep.subr.bf16.mxu0 0
  %210 = vmatpush2.bf16.msra.mxu0 0
  %211 = vmatprep.subr.bf16.mxu0 0
  %212 = vmatpush2.bf16.msra.mxu0 0
  %213 = vmatprep.subr.bf16.mxu0 0
  %214 = vmatpush2.bf16.msra.mxu0 0
  %215 = vmatprep.subr.bf16.mxu0 0
  %216 = vmatpush2.bf16.msra.mxu0 0
  %217 = vmatprep.subr.bf16.mxu0 0
  %218 = vmatpush2.bf16.msra.mxu0 0
  %219 = vmatprep.subr.bf16.mxu0 0
  %220 = vmatpush2.bf16.msra.mxu0 0
  %221 = vmatprep.mubr.bf16.mxu0 0
  %222 = vmatmul.mubr.bf16.gmra.mxu0 %v187
  %v223 = vpop.f32.mrf.mxu0
  %v224 = vadd.f32 %v178, %v223
  %v225 = vpop.f32.mrf.mxu0
  %v226 = vpop.f32.mrf.mxu0
  %v227 = vadd.f32 %v178, %v226
  %v228 = vpop.f32.mrf.mxu0
  %229 = vdwg.mxu0
  %v230 = vmax.f32 %v224, 0.0
  %v231 = vmax.f32 %v227, 0.0
  %v232 = vpack.c.bf16 %v231, %v230
  %v233 = vld [vmem:[%s6] sm:$0xf]
  %v234 = vld [vmem:[%s6 + $0x4] sm:$0xf]
  %v235 = vld [vmem:[%s6 + $0x8] sm:$0xf]
  %v236 = vld [vmem:[%s6 + $0xc] sm:$0xf]
  %v241 = vunpack.c.l.b16 %v233
  %v242 = vunpack.c.l.b16 %v234
  %v243 = vunpack.c.l.b16 %v235
  %v244 = vunpack.c.l.b16 %v236
  %v245 = vpack.c.b16 %v242, %v241
  %v246 = vpack.c.b16 %v244, %v243
  %v250 = vsel %vm125, %v232, 0
  %252 = vmatprep.subr.bf16.mxu0 0
  %253 = vmatpush1.bf16.msra.mxu0 0
  %254 = vmatprep.subr.bf16.mxu0 0
  %255 = vmatpush1.bf16.msra.mxu0 0
  %256 = vmatprep.subr.bf16.mxu0 0
  %257 = vmatpush1.bf16.msra.mxu0 0
  %258 = vmatprep.subr.bf16.mxu0 0
  %259 = vmatpush1.bf16.msra.mxu0 0
  %260 = vmatprep.subr.bf16.mxu0 0
  %261 = vmatpush1.bf16.msra.mxu0 0
  %262 = vmatprep.subr.bf16.mxu0 0
  %263 = vmatpush1.bf16.msra.mxu0 0
  %264 = vmatprep.subr.bf16.mxu0 0
  %265 = vmatpush1.bf16.msra.mxu0 %v246
  %266 = vmatprep.subr.bf16.mxu0 0
  %267 = vmatpush1.bf16.msra.mxu0 %v245
  %268 = vmatprep.subr.bf16.mxu0 0
  %269 = vmatpush2.bf16.msra.mxu0 0
  %270 = vmatprep.subr.bf16.mxu0 0
  %271 = vmatpush2.bf16.msra.mxu0 0
  %272 = vmatprep.subr.bf16.mxu0 0
  %273 = vmatpush2.bf16.msra.mxu0 0
  %274 = vmatprep.subr.bf16.mxu0 0
  %275 = vmatpush2.bf16.msra.mxu0 0
  %276 = vmatprep.subr.bf16.mxu0 0
  %277 = vmatpush2.bf16.msra.mxu0 0
  %278 = vmatprep.subr.bf16.mxu0 0
  %279 = vmatpush2.bf16.msra.mxu0 0
  %280 = vmatprep.subr.bf16.mxu0 0
  %281 = vmatpush2.bf16.msra.mxu0 0
  %282 = vmatprep.subr.bf16.mxu0 0
  %283 = vmatpush2.bf16.msra.mxu0 0
  %284 = vmatprep.mubr.bf16.mxu0 0
  %285 = vmatmul.mubr.bf16.gmra.mxu0 %v250
  %v286 = vpop.f32.mrf.mxu0
  %v287 = vadd.f32 0.0, %v286
  %v288 = vpop.f32.mrf.mxu0
  %v289 = vpop.f32.mrf.mxu0
  %v290 = vadd.f32 0.0, %v289
  %v291 = vpop.f32.mrf.mxu0
  %292 = vdwg.mxu0
  %v293 = vpack.c.bf16 %v290, %v287
  %v294 = vld [vmem:[%s7] sm:$0x1]
  %v296 = vlaneseq
  %v297 = vshrl.u32 %v296, 7
  %v298 = vsub.s32 0, %v297
  %v299 = vrot.slane %v294, %v298
  %301 = vmatprep.subr.bf16.mxu0 0
  %302 = vmatpush1.bf16.msra.mxu0 0
  %303 = vmatprep.subr.bf16.mxu0 0
  %304 = vmatpush1.bf16.msra.mxu0 0
  %305 = vmatprep.subr.bf16.mxu0 0
  %306 = vmatpush1.bf16.msra.mxu0 0
  %307 = vmatprep.subr.bf16.mxu0 0
  %308 = vmatpush1.bf16.msra.mxu0 0
  %309 = vmatprep.subr.bf16.mxu0 0
  %310 = vmatpush1.bf16.msra.mxu0 0
  %311 = vmatprep.subr.bf16.mxu0 0
  %312 = vmatpush1.bf16.msra.mxu0 0
  %313 = vmatprep.subr.bf16.mxu0 0
  %314 = vmatpush1.bf16.msra.mxu0 0
  %315 = vmatprep.subr.bf16.mxu0 0
  %316 = vmatpush1.bf16.msra.mxu0 %v293
  %317 = vmatprep.subr.bf16.mxu0 0
  %318 = vmatpush2.bf16.msra.mxu0 0
  %319 = vmatprep.subr.bf16.mxu0 0
  %320 = vmatpush2.bf16.msra.mxu0 0
  %321 = vmatprep.subr.bf16.mxu0 0
  %322 = vmatpush2.bf16.msra.mxu0 0
  %323 = vmatprep.subr.bf16.mxu0 0
  %324 = vmatpush2.bf16.msra.mxu0 0
  %325 = vmatprep.subr.bf16.mxu0 0
  %326 = vmatpush2.bf16.msra.mxu0 0
  %327 = vmatprep.subr.bf16.mxu0 0
  %328 = vmatpush2.bf16.msra.mxu0 0
  %329 = vmatprep.subr.bf16.mxu0 0
  %330 = vmatpush2.bf16.msra.mxu0 0
  %331 = vmatprep.subr.bf16.mxu0 0
  %332 = vmatpush2.bf16.msra.mxu0 0
  %333 = vmatprep.mubr.bf16.mxu0 0
  %334 = vmatmul.mubr.bf16.gmra.mxu0 %v187
  %v335 = vpop.f32.mrf.mxu0
  %v336 = vadd.f32 %v299, %v335
  %v337 = vpop.f32.mrf.mxu0
  %v338 = vpop.f32.mrf.mxu0
  %v339 = vadd.f32 %v299, %v338
  %v340 = vpop.f32.mrf.mxu0
  %341 = vdwg.mxu0
  %v342 = vmax.f32 %v336, 0.0
  %v343 = vmax.f32 %v339, 0.0
  %v344 = vpack.c.bf16 %v343, %v342
  %v345 = vld [vmem:[%s8] sm:$0xf]
  %v346 = vld [vmem:[%s8 + $0x4] sm:$0xf]
  %v347 = vld [vmem:[%s8 + $0x8] sm:$0xf]
  %v348 = vld [vmem:[%s8 + $0xc] sm:$0xf]
  %v353 = vunpack.c.l.b16 %v345
  %v354 = vunpack.c.l.b16 %v346
  %v355 = vunpack.c.l.b16 %v347
  %v356 = vunpack.c.l.b16 %v348
  %v357 = vpack.c.b16 %v354, %v353
  %v358 = vpack.c.b16 %v356, %v355
  %v362 = vsel %vm125, %v344, 0
  %364 = vmatprep.subr.bf16.mxu0 0
  %365 = vmatpush1.bf16.msra.mxu0 0
  %366 = vmatprep.subr.bf16.mxu0 0
  %367 = vmatpush1.bf16.msra.mxu0 0
  %368 = vmatprep.subr.bf16.mxu0 0
  %369 = vmatpush1.bf16.msra.mxu0 0
  %370 = vmatprep.subr.bf16.mxu0 0
  %371 = vmatpush1.bf16.msra.mxu0 0
  %372 = vmatprep.subr.bf16.mxu0 0
  %373 = vmatpush1.bf16.msra.mxu0 0
  %374 = vmatprep.subr.bf16.mxu0 0
  %375 = vmatpush1.bf16.msra.mxu0 0
  %376 = vmatprep.subr.bf16.mxu0 0
  %377 = vmatpush1.bf16.msra.mxu0 %v358
  %378 = vmatprep.subr.bf16.mxu0 0
  %379 = vmatpush1.bf16.msra.mxu0 %v357
  %380 = vmatprep.subr.bf16.mxu0 0
  %381 = vmatpush2.bf16.msra.mxu0 0
  %382 = vmatprep.subr.bf16.mxu0 0
  %383 = vmatpush2.bf16.msra.mxu0 0
  %384 = vmatprep.subr.bf16.mxu0 0
  %385 = vmatpush2.bf16.msra.mxu0 0
  %386 = vmatprep.subr.bf16.mxu0 0
  %387 = vmatpush2.bf16.msra.mxu0 0
  %388 = vmatprep.subr.bf16.mxu0 0
  %389 = vmatpush2.bf16.msra.mxu0 0
  %390 = vmatprep.subr.bf16.mxu0 0
  %391 = vmatpush2.bf16.msra.mxu0 0
  %392 = vmatprep.subr.bf16.mxu0 0
  %393 = vmatpush2.bf16.msra.mxu0 0
  %394 = vmatprep.subr.bf16.mxu0 0
  %395 = vmatpush2.bf16.msra.mxu0 0
  %396 = vmatprep.mubr.bf16.mxu0 0
  %397 = vmatmul.mubr.bf16.gmra.mxu0 %v362
  %v398 = vpop.f32.mrf.mxu0
  %v399 = vadd.f32 0.0, %v398
  %v400 = vpop.f32.mrf.mxu0
  %v401 = vpop.f32.mrf.mxu0
  %v402 = vadd.f32 0.0, %v401
  %v403 = vpop.f32.mrf.mxu0
  %404 = vdwg.mxu0
  %v405 = vpack.c.bf16 %v402, %v399
  %v406 = vld [vmem:[%s9] sm:$0x1]
  %v408 = vlaneseq
  %v409 = vshrl.u32 %v408, 7
  %v410 = vsub.s32 0, %v409
  %v411 = vrot.slane %v406, %v410
  %413 = vmatprep.subr.bf16.mxu0 0
  %414 = vmatpush1.bf16.msra.mxu0 0
  %415 = vmatprep.subr.bf16.mxu0 0
  %416 = vmatpush1.bf16.msra.mxu0 0
  %417 = vmatprep.subr.bf16.mxu0 0
  %418 = vmatpush1.bf16.msra.mxu0 0
  %419 = vmatprep.subr.bf16.mxu0 0
  %420 = vmatpush1.bf16.msra.mxu0 0
  %421 = vmatprep.subr.bf16.mxu0 0
  %422 = vmatpush1.bf16.msra.mxu0 0
  %423 = vmatprep.subr.bf16.mxu0 0
  %424 = vmatpush1.bf16.msra.mxu0 0
  %425 = vmatprep.subr.bf16.mxu0 0
  %426 = vmatpush1.bf16.msra.mxu0 0
  %427 = vmatprep.subr.bf16.mxu0 0
  %428 = vmatpush1.bf16.msra.mxu0 %v405
  %429 = vmatprep.subr.bf16.mxu0 0
  %430 = vmatpush2.bf16.msra.mxu0 0
  %431 = vmatprep.subr.bf16.mxu0 0
  %432 = vmatpush2.bf16.msra.mxu0 0
  %433 = vmatprep.subr.bf16.mxu0 0
  %434 = vmatpush2.bf16.msra.mxu0 0
  %435 = vmatprep.subr.bf16.mxu0 0
  %436 = vmatpush2.bf16.msra.mxu0 0
  %437 = vmatprep.subr.bf16.mxu0 0
  %438 = vmatpush2.bf16.msra.mxu0 0
  %439 = vmatprep.subr.bf16.mxu0 0
  %440 = vmatpush2.bf16.msra.mxu0 0
  %441 = vmatprep.subr.bf16.mxu0 0
  %442 = vmatpush2.bf16.msra.mxu0 0
  %443 = vmatprep.subr.bf16.mxu0 0
  %444 = vmatpush2.bf16.msra.mxu0 0
  %445 = vmatprep.mubr.bf16.mxu0 0
  %446 = vmatmul.mubr.bf16.gmra.mxu0 %v187
  %v447 = vpop.f32.mrf.mxu0
  %v448 = vadd.f32 %v411, %v447
  %v449 = vpop.f32.mrf.mxu0
  %v450 = vpop.f32.mrf.mxu0
  %v451 = vadd.f32 %v411, %v450
  %v452 = vpop.f32.mrf.mxu0
  %453 = vdwg.mxu0
  %v454 = vmax.f32 %v448, 0.0
  %v455 = vmax.f32 %v451, 0.0
  %v456 = vpack.c.bf16 %v455, %v454
  %v457 = vld [vmem:[%s10] sm:$0xf]
  %v458 = vld [vmem:[%s10 + $0x4] sm:$0xf]
  %v459 = vld [vmem:[%s10 + $0x8] sm:$0xf]
  %v460 = vld [vmem:[%s10 + $0xc] sm:$0xf]
  %v461 = vld [vmem:[%s11] sm:$0x1]
  %v463 = vlaneseq
  %v464 = vshrl.u32 %v463, 7
  %v465 = vsub.s32 0, %v464
  %v466 = vrot.slane %v461, %v465
  %v472 = vunpack.c.l.b16 %v457
  %v473 = vunpack.c.l.b16 %v458
  %v474 = vunpack.c.l.b16 %v459
  %v475 = vunpack.c.l.b16 %v460
  %v476 = vpack.c.b16 %v473, %v472
  %v477 = vpack.c.b16 %v475, %v474
  %v481 = vsel %vm125, %v456, 0
  %483 = vmatprep.subr.bf16.mxu0 0
  %484 = vmatpush1.bf16.msra.mxu0 0
  %485 = vmatprep.subr.bf16.mxu0 0
  %486 = vmatpush1.bf16.msra.mxu0 0
  %487 = vmatprep.subr.bf16.mxu0 0
  %488 = vmatpush1.bf16.msra.mxu0 0
  %489 = vmatprep.subr.bf16.mxu0 0
  %490 = vmatpush1.bf16.msra.mxu0 0
  %491 = vmatprep.subr.bf16.mxu0 0
  %492 = vmatpush1.bf16.msra.mxu0 0
  %493 = vmatprep.subr.bf16.mxu0 0
  %494 = vmatpush1.bf16.msra.mxu0 0
  %495 = vmatprep.subr.bf16.mxu0 0
  %496 = vmatpush1.bf16.msra.mxu0 %v477
  %497 = vmatprep.subr.bf16.mxu0 0
  %498 = vmatpush1.bf16.msra.mxu0 %v476
  %499 = vmatprep.subr.bf16.mxu0 0
  %500 = vmatpush2.bf16.msra.mxu0 0
  %501 = vmatprep.subr.bf16.mxu0 0
  %502 = vmatpush2.bf16.msra.mxu0 0
  %503 = vmatprep.subr.bf16.mxu0 0
  %504 = vmatpush2.bf16.msra.mxu0 0
  %505 = vmatprep.subr.bf16.mxu0 0
  %506 = vmatpush2.bf16.msra.mxu0 0
  %507 = vmatprep.subr.bf16.mxu0 0
  %508 = vmatpush2.bf16.msra.mxu0 0
  %509 = vmatprep.subr.bf16.mxu0 0
  %510 = vmatpush2.bf16.msra.mxu0 0
  %511 = vmatprep.subr.bf16.mxu0 0
  %512 = vmatpush2.bf16.msra.mxu0 0
  %513 = vmatprep.subr.bf16.mxu0 0
  %514 = vmatpush2.bf16.msra.mxu0 0
  %515 = vmatprep.mubr.bf16.mxu0 0
  %516 = vmatmul.mubr.bf16.gmra.mxu0 %v481
  %v517 = vpop.f32.mrf.mxu0
  %v518 = vadd.f32 %v466, %v517
  %v519 = vpop.f32.mrf.mxu0
  %v520 = vpop.f32.mrf.mxu0
  %v521 = vadd.f32 %v466, %v520
  %v522 = vpop.f32.mrf.mxu0
  %523 = vdwg.mxu0
  %524 = vst [vmem:[%s12] sm:$0xff] %v518
  %525 = vst [vmem:[%s12 + $0x8] sm:$0xff] %v521
  // Predicated region
  $region50: #{net_forward.1} parent=0 // pred_check
    _
  $region51: #{net_forward.1} parent=0 // pred_check_branch
    %527 = sbr.rel (0) target = $region53
  $region52: #{net_forward.1} parent=0 // pred_region
    _
  $region53: #{net_forward.1} parent=0 // pred_fallthru
    _
  // Predicated region
  $region54: #{net_forward.1} parent=0 // pred_check
    _
  $region55: #{net_forward.1} parent=0 // pred_check_branch
    %529 = sbr.rel (0) target = $region57
  $region56: #{net_forward.1} parent=0 // pred_region
    _
  $region57: #{net_forward.1} parent=0 // pred_fallthru
    _

</llo_original>
